<compile_context>
chip_gen: v6e
topology: v6e:2x2x1
jax: 0.10.0
libtpu: 0.0.40
codegen_flags: <defaults>
</compile_context>

<pallas_src>
import jax
import jax.numpy as jnp
from jax.experimental import pallas as pl
from jax.experimental.pallas import tpu as pltpu

_LANE = 128
_SUBLANE = 8
_MAX_TF = 4096                       # lane-tile cap (multiple of 128)
_TARGET_TILE_BYTES = 2 * 1024 * 1024


def _round_up(x, m):
    return (x + m - 1) // m * m


def _drop_path_kernel(x_ref, scale_ref, o_ref):
    # x_ref / o_ref: (TB, TF) VMEM tile; scale_ref: (TB, 1) per-sample scale.
    # Single broadcast multiply over the lane axis (VPU); one load + one store
    # per element.
    o_ref[...] = (x_ref[...] * scale_ref[...]).astype(o_ref.dtype)


def _choose_tiles(B, feat, itemsize):
    """Pick (tb, tf) so each block dim is a multiple of (8, 128) or the full dim."""
    # Feature (lane) tile.
    if feat % _LANE == 0:
        tf = min(feat, _MAX_TF)
    else:
        tf = feat                    # full-dim block is always legal

    # Batch (sublane) tile: fill ~2 MiB per tile.
    rows = max(1, _TARGET_TILE_BYTES // (tf * itemsize))
    if B <= _SUBLANE or rows >= B:
        tb = B                       # full-dim block
    else:
        tb = max(_SUBLANE, (rows // _SUBLANE) * _SUBLANE)
        tb = min(tb, (B // _SUBLANE) * _SUBLANE)
    return tb, tf


def drop_path(x, drop_prob, training, key):
    """Pallas DropPath. `x` is (B, ...) of any rank; the mask is per-sample."""
    if drop_prob is None or drop_prob == 0.0 or not training:
        return x

    keep_prob = 1.0 - drop_prob
    B = x.shape[0]
    feat = 1
    for d in x.shape[1:]:
        feat *= d

    # keep iff floor(keep_prob + u) == 1  <=>  u >= drop_prob.
    u = jax.random.uniform(key, (B,), dtype=jnp.float32)
    scale = (u >= jnp.float32(drop_prob)).astype(jnp.float32) / jnp.float32(keep_prob)
    scale = scale.astype(x.dtype).reshape(B, 1)    # apply in input dtype (as torch does)

    itemsize = jnp.dtype(x.dtype).itemsize
    x2 = x.reshape(B, feat)

    # Rare fallback: huge, non-128-aligned feature dim -> pad feature axis only,
    # so tiles stay small enough for VMEM.  Batch is never padded.
    feat_pad = feat
    if feat % _LANE != 0 and feat > _MAX_TF:
        feat_pad = _round_up(feat, _LANE)
        x2 = jnp.pad(x2, ((0, 0), (0, feat_pad - feat)))

    tb, tf = _choose_tiles(B, feat_pad, itemsize)

    out = pl.pallas_call(
        _drop_path_kernel,
        out_shape=jax.ShapeDtypeStruct((B, feat_pad), x.dtype),
        grid=(pl.cdiv(B, tb), pl.cdiv(feat_pad, tf)),
        in_specs=[
            pl.BlockSpec((tb, tf), lambda i, j: (i, j)),
            pl.BlockSpec((tb, 1), lambda i, j: (i, 0)),
        ],
        out_specs=pl.BlockSpec((tb, tf), lambda i, j: (i, j)),
        compiler_params=pltpu.CompilerParams(
            dimension_semantics=("parallel", "parallel")),
    )(x2, scale)

    if feat_pad != feat:
        out = out[:, :feat]
    return out.reshape(x.shape)


class DropPath:
    """Drop paths (Stochastic Depth) per sample, Pallas-backed."""

    def __init__(self, drop_prob=None):
        self.drop_prob = drop_prob
        self.training = True

    def __call__(self, x, key):
        return drop_path(x, self.drop_prob, self.training, key)

    def extra_repr(self):
        return 'p={}'.format(self.drop_prob)


if __name__ == "__main__":
    key = jax.random.PRNGKey(0)
    kx, kmask, kx2, kmask2 = jax.random.split(key, 4)

    # Main check: f32, small batch (exercises the full-dim batch block, no padding).
    B, C, H, W = 2, 4, 16, 16
    x = jax.random.normal(kx, (B, C, H, W), dtype=jnp.float32)

    drop_prob = 0.5
    module = DropPath(drop_prob)
    module.training = True

    out = jax.block_until_ready(module(x, kmask))

    keep_prob = 1.0 - drop_prob
    u = jax.random.uniform(kmask, (B,), dtype=jnp.float32)
    scale = (u >= jnp.float32(drop_prob)).astype(jnp.float32) / jnp.float32(keep_prob)
    ref = x * scale.reshape(B, 1, 1, 1)
    assert out.shape == x.shape and out.dtype == x.dtype
    assert jnp.allclose(out, ref, atol=1e-6, rtol=1e-6)

    # Secondary check: bf16, odd batch and non-128-multiple feature dim
    # (exercises full-dim lane block path).
    B2, T2, D2 = 5, 3, 320                      # feat = 960, not a multiple of 128
    x2 = jax.random.normal(kx2, (B2, T2, D2), dtype=jnp.bfloat16)
    module2 = DropPath(0.25)
    out2 = jax.block_until_ready(module2(x2, kmask2))
    u2 = jax.random.uniform(kmask2, (B2,), dtype=jnp.float32)
    scale2 = ((u2 >= jnp.float32(0.25)).astype(jnp.float32) / jnp.float32(0.75))
    scale2 = scale2.astype(x2.dtype).reshape(B2, 1, 1)
    ref2 = x2 * scale2
    assert out2.shape == x2.shape and out2.dtype == x2.dtype
    assert jnp.allclose(out2.astype(jnp.float32), ref2.astype(jnp.float32),
                        atol=1e-2, rtol=1e-2)

    # Eval / p=0 path must be identity.
    module.training = False
    out_eval = jax.block_until_ready(module(x, kmask))
    assert jnp.array_equal(out_eval, x)
    assert jnp.array_equal(DropPath(0.0)(x, kmask), x)

    print("KERNEL_OK")
</pallas_src>

<mosaic_0001>
module attributes {stable_mosaic.version = 11 : i64} {
  func.func @_drop_path_kernel(%arg0: i32, %arg1: i32, %arg2: memref<2x1024xf32, #tpu.memory_space<vmem>>, %arg3: memref<2x1xf32, #tpu.memory_space<vmem>>, %arg4: memref<2x1024xf32, #tpu.memory_space<vmem>>) attributes {dimension_semantics = [#tpu.dimension_semantics<parallel>, #tpu.dimension_semantics<parallel>], iteration_bounds = array<i64: 1, 1>, scalar_prefetch = 0 : i64, scratch_operands = 0 : i64, tpu.core_type = #tpu.core_type<tc>, window_params = [{transform_indices = @transform_0, window_bounds = array<i64: 2, 1024>}, {transform_indices = @transform_1, window_bounds = array<i64: 2, 1>}, {transform_indices = @transform_2, window_bounds = array<i64: 2, 1024>}]} {
    %c0 = arith.constant 0 : index
    %c0_0 = arith.constant 0 : index
    %0 = vector.load %arg2[%c0, %c0_0] : memref<2x1024xf32, #tpu.memory_space<vmem>>, vector<2x1024xf32>
    %c0_1 = arith.constant 0 : index
    %c0_2 = arith.constant 0 : index
    %1 = vector.load %arg3[%c0_1, %c0_2] : memref<2x1xf32, #tpu.memory_space<vmem>>, vector<2x1xf32>
    %2 = vector.broadcast %1 : vector<2x1xf32> to vector<2x1024xf32>
    %3 = arith.mulf %0, %2 : vector<2x1024xf32>
    %c0_3 = arith.constant 0 : index
    %c0_4 = arith.constant 0 : index
    %4 = vector.load %arg4[%c0_3, %c0_4] : memref<2x1024xf32, #tpu.memory_space<vmem>>, vector<2x1024xf32>
    tpu.vector_store %arg4[%c0_3, %c0_4], %3 {strides = array<i32>} : memref<2x1024xf32, #tpu.memory_space<vmem>>, vector<2x1024xf32>,
    return
  }
  func.func @transform_0(%arg0: i32, %arg1: i32) -> (i32, i32) {
    %c0_i32 = arith.constant 0 : i32
    return %arg0, %arg1 : i32, i32
  }
  func.func @transform_1(%arg0: i32, %arg1: i32) -> (i32, i32) {
    %c0_i32 = arith.constant 0 : i32
    %c0_i32_0 = arith.constant 0 : i32
    return %arg0, %c0_i32 : i32, i32
  }
  func.func @transform_2(%arg0: i32, %arg1: i32) -> (i32, i32) {
    %c0_i32 = arith.constant 0 : i32
    return %arg0, %arg1 : i32, i32
  }
}

</mosaic_0001>

<llo_original>
// kernel: tpu_custom_call.1
$region0: #{tpu_custom_call.1}
  #allocation0 [shape = 'u32[]', space=smem, size = 0x4, offset = 0x4, fixed_abs, tag = 'smem constant byte address 0x4 - core index']
  #allocation1 [shape = 'u32[144,128]{1,0:T(1,128)}', space=vmem, size = 0x12000, scoped, tag = 'internal scratch']
  %s0 = inlined_call_operand.hbm [shape: f32[2,1024], index: 0, kind: input, shape index: {}]
  %s1 = inlined_call_operand.vmem [shape: f32[2,1], index: 1, kind: input, shape index: {}]
  %s2 = inlined_call_operand.hbm [shape: f32[2,1024], index: 2, kind: output, shape index: {}]
  %s3 = sld [smem:[#allocation0]]
  $region22: #{tpu_custom_call.1} parent=0
    _
  %s5 = ssub.s32 1, %s3
  %s6 = scalar_select 0, %s5, %s3
  $region1: #{tpu_custom_call.1} parent=0
    #allocation2 [shape = 'u8[8192]{0}', space=vmem, size = 0x2000, scoped, tag = 'input window, operand 0, single buffered']
    #allocation3 [shape = 's32[1]{0}', space=sflag, size = 0x4, scoped, tag = 'scoped memory for tpu_custom_call.1']
    #allocation4 [shape = 's32[1]{0}', space=sflag, size = 0x4, scoped, tag = 'scoped memory for tpu_custom_call.1']
    #allocation5 [shape = 'u8[8192]{0}', space=vmem, size = 0x2000, scoped, tag = 'output window, operand 0, single buffered']
    %7 = vsyncpa [#allocation3], 0
    %8 = vsyncpa [#allocation4], 0
    // Predicated region
    $region2: #{tpu_custom_call.1} parent=1 // pred_check
      _
    $region3: #{tpu_custom_call.1} parent=1 // pred_check_branch
      %10 = sbr.rel (0) target = $region5
    $region4: #{tpu_custom_call.1} parent=1 // pred_region
      %s12 = ssub.s32 256, 256
      %13 = vsyncadd [#allocation3], %s12
      %s15 = sshll.u32 [#allocation2], 4
      %s16 = int_to_ptr.vmem [resolvable:$true] %s15
      %18 = dma.hbm_to_vmem [thread:$0]  %s0, 256, %s16, [#allocation3]
    $region5: #{tpu_custom_call.1} parent=1 // pred_fallthru
      _
    // Predicated region
    $region6: #{tpu_custom_call.1} parent=1 // pred_check
      _
    $region7: #{tpu_custom_call.1} parent=1 // pred_check_branch
      %20 = sbr.rel (0) target = $region9
    $region8: #{tpu_custom_call.1} parent=1 // pred_region
      _
    $region9: #{tpu_custom_call.1} parent=1 // pred_fallthru
      _
    // Predicated region
    $region10: #{tpu_custom_call.1} parent=1 // pred_check
      _
    $region11: #{tpu_custom_call.1} parent=1 // pred_check_branch
      %22 = sbr.rel (0) target = $region13
    $region12: #{tpu_custom_call.1} parent=1 // pred_region
      %23 = dma.done [#allocation3], 256
    $region13: #{tpu_custom_call.1} parent=1 // pred_fallthru
      _
    %v24 = vld [vmem:[#allocation2] sm:$0xff]
    %v25 = vld [vmem:[#allocation2 + $0x8] sm:$0xff]
    %v26 = vld [vmem:[%s1] sm:$0x3]
    %28 = vset.pattern.permute.xlu0 0
    %29 = vperm.xlu0 %28, %v26
    %v30 = vpop.permute.xlu0 %29
    %v32 = vunpack.c.l.s4 269488144
    %v33 = vunpack.c.0.s8 %v32
    %v34 = vlaneseq
    %v35 = vshrl.u32 %v34, 7
    %v36 = vsub.s32 %v33, %v35
    %v37 = vrot.slane %v30, %v36
    %v39 = vmul.f32 %v24, %v37
    %v40 = vmul.f32 %v25, %v37
    %41 = vst [vmem:[#allocation5] sm:$0xff] %v39
    %42 = vst [vmem:[#allocation5 + $0x8] sm:$0xff] %v40
    // Predicated region
    $region14: #{tpu_custom_call.1} parent=1 // pred_check
      _
    $region15: #{tpu_custom_call.1} parent=1 // pred_check_branch
      %44 = sbr.rel (0) target = $region17
    $region16: #{tpu_custom_call.1} parent=1 // pred_region
      %s46 = ssub.s32 256, 256
      %47 = vsyncadd [#allocation4], %s46
      %s49 = sshll.u32 [#allocation5], 4
      %s50 = int_to_ptr.vmem [resolvable:$true] %s49
      %52 = dma.vmem_to_hbm [thread:$0]  %s50, 256, %s2, [#allocation4]
    $region17: #{tpu_custom_call.1} parent=1 // pred_fallthru
      _
    // Predicated region
    $region18: #{tpu_custom_call.1} parent=1 // pred_check
      _
    $region19: #{tpu_custom_call.1} parent=1 // pred_check_branch
      %54 = sbr.rel (0) target = $region21
    $region20: #{tpu_custom_call.1} parent=1 // pred_region
      %55 = dma.done [#allocation4], 256
    $region21: #{tpu_custom_call.1} parent=1 // pred_fallthru
      _
    %56 = vsyncpa [#allocation3], 1
    %57 = vsyncpa [#allocation4], 1

</llo_original>
